<compile_context>
chip_gen: v5e
topology: v5e:2x2
jax: 0.10.0
libtpu: 0.0.40
codegen_flags: <defaults>
</compile_context>

<pallas_src>
import functools

import jax
import jax.numpy as jnp
from jax.experimental import pallas as pl
from jax.experimental.pallas import tpu as pltpu

DEFAULT_EPSILON = 0.1


def _vmem_capacity_bytes():
    """Best-effort per-TensorCore VMEM capacity (conservative v7x fallback)."""
    try:
        cap = getattr(pltpu.get_tpu_info(), "vmem_capacity_bytes", None)
        if cap:
            return int(cap)
    except Exception:
        pass
    return 64 * 1024 * 1024


def _tiling_policy():
    """Per-generation (preds block budget, scoped vmem limit).

    v5e/v6e (128 MiB VMEM): ~6 MiB native blocks amortize the ~0.35 us
    per-grid-step overhead. v7x (64 MiB VMEM): keep blocks ~2.5 MiB since the
    double-buffered inputs plus f32/int32 temporaries are ~4-6x the native
    block bytes and would spill at the v6e budget.
    """
    vmem = _vmem_capacity_bytes()
    if vmem >= 96 * 1024 * 1024:          # v5e / v6e class (128 MiB per TC)
        return 6 * 1024 * 1024, 64 * 1024 * 1024
    return (5 * 1024 * 1024) // 2, 48 * 1024 * 1024   # v7x class (64 MiB per TC)


def _pick_tile_n(n, c, itemsize, block_budget):
    """Largest multiple-of-8 row tile under the budget, but always >= 2 tiles
    (when n > 8) so the 'parallel' grid axis can use both v7x TensorCores."""
    rows = block_budget // max(1, c * itemsize)
    rows = max(8, (rows // 8) * 8)                    # no artificial upper cap
    if n <= 8:
        return n                                      # single full-batch block
    half = ((-(-n // 2)) + 7) // 8 * 8                # round_up(cdiv(n,2), 8) < n
    return min(rows, half)


def _lsce_tile_kernel(preds_ref, target_ref, out_ref, *, n_rows_total):
    """Per-row-tile partial sums of the smoothing and NLL loss terms."""
    i = pl.program_id(0)
    x_native = preds_ref[...]                          # (TILE_N, C) native dtype
    tn, c = x_native.shape
    x = x_native.astype(jnp.float32)

    # Numerically stable pieces of log_softmax; log_preds itself is never built.
    m = jnp.max(x, axis=-1, keepdims=True)             # (TILE_N, 1)
    z = x - m
    lse = jnp.log(jnp.sum(jnp.exp(z), axis=-1, keepdims=True))   # (TILE_N, 1)
    sum_z = jnp.sum(z, axis=-1, keepdims=True)                   # (TILE_N, 1)

    # One-hot pick in the native dtype (bf16 compare/select is 2 elem/lane-op
    # on v6e/v7x); exact, since exactly one element per row is nonzero.
    col_ids = jax.lax.broadcasted_iota(jnp.int32, (tn, c), 1)
    onehot = col_ids == target_ref[...]                          # (TILE_N, C)
    picked_x = jnp.sum(jnp.where(onehot, x_native, 0),
                       axis=-1, keepdims=True).astype(jnp.float32)

    loss_rows = -(sum_z - c * lse)                    # -sum_c log_softmax
    nll_rows = -((picked_x - m) - lse)                # -log_softmax[target]

    # Mask ONLY the per-row results of the ragged tail. Use a select (never a
    # multiply) so NaN/Inf in padded rows cannot propagate via NaN * 0.
    row_ids = i * tn + jax.lax.broadcasted_iota(jnp.int32, (tn, 1), 0)
    row_mask = row_ids < n_rows_total                            # (TILE_N, 1)
    loss_part = jnp.sum(jnp.where(row_mask, loss_rows, 0.0))     # scalar
    nll_part = jnp.sum(jnp.where(row_mask, nll_rows, 0.0))       # scalar

    # Lane-dense (8, 128) partial-sum block: [0,0] = smoothing-term partial
    # sum, [0,1] = NLL partial sum, rest zero (single unmasked store).
    rr = jax.lax.broadcasted_iota(jnp.int32, out_ref.shape, 0)
    cc = jax.lax.broadcasted_iota(jnp.int32, out_ref.shape, 1)
    out_ref[...] = jnp.where(
        (rr == 0) & (cc == 0), loss_part,
        jnp.where((rr == 0) & (cc == 1), nll_part, 0.0))


def label_smoothing_cross_entropy(preds, target, epsilon=DEFAULT_EPSILON,
                                  reduction="mean", tile_n=None):
    """Pallas implementation of LabelSmoothingCrossEntropy.forward."""
    if reduction not in ("mean", "sum"):
        # TODO(synk): reduction='none' (per-sample, unreduced output) not implemented.
        raise NotImplementedError("reduction must be 'mean' or 'sum'")

    n, c = preds.shape
    itemsize = jnp.dtype(preds.dtype).itemsize
    block_budget, vmem_limit = _tiling_policy()
    if tile_n is None:
        tile_n = _pick_tile_n(n, c, itemsize, block_budget)
    num_tiles = pl.cdiv(n, tile_n)
    target2d = target.astype(jnp.int32).reshape(n, 1)

    cost = pl.CostEstimate(
        flops=int(6 * n * c),
        transcendentals=int(n * c),
        bytes_accessed=int(n * c * itemsize + n * 4 + num_tiles * 8 * 128 * 4),
    )

    partials = pl.pallas_call(
        functools.partial(_lsce_tile_kernel, n_rows_total=n),
        out_shape=jax.ShapeDtypeStruct((num_tiles * 8, 128), jnp.float32),
        grid=(num_tiles,),
        in_specs=[
            pl.BlockSpec((tile_n, c), lambda i: (i, 0)),
            pl.BlockSpec((tile_n, 1), lambda i: (i, 0)),
        ],
        out_specs=pl.BlockSpec((8, 128), lambda i: (i, 0)),
        compiler_params=pltpu.CompilerParams(
            dimension_semantics=("parallel",),
            vmem_limit_bytes=vmem_limit,
        ),
        cost_estimate=cost,
    )(preds, target2d)

    partials = partials.reshape(num_tiles, 8, 128)
    loss_sum = jnp.sum(partials[:, 0, 0])
    nll_sum = jnp.sum(partials[:, 0, 1])
    if reduction == "mean":
        loss = loss_sum / n
        nll = nll_sum / n
    else:  # 'sum'
        loss = loss_sum
        nll = nll_sum
    return epsilon * (loss / c) + (1.0 - epsilon) * nll


def _reference(preds, target, epsilon=DEFAULT_EPSILON, reduction="mean"):
    """Pure-JAX reference mirroring the PyTorch module."""
    c = preds.shape[-1]
    log_preds = jax.nn.log_softmax(preds.astype(jnp.float32), axis=-1)
    loss_rows = -jnp.sum(log_preds, axis=-1)
    nll_rows = -jnp.take_along_axis(
        log_preds, target[:, None].astype(jnp.int32), axis=-1)[:, 0]
    if reduction == "mean":
        loss, nll = jnp.mean(loss_rows), jnp.mean(nll_rows)
    else:
        loss, nll = jnp.sum(loss_rows), jnp.sum(nll_rows)
    return epsilon * (loss / c) + (1.0 - epsilon) * nll


if __name__ == "__main__":
    key = jax.random.PRNGKey(0)
    k1, k2, k3, k4, k5, k6 = jax.random.split(key, 6)

    # Case 1: small batch of f32 logits, single tile (N <= 8 path).
    N1, C1 = 8, 32
    preds1 = jax.random.normal(k1, (N1, C1), dtype=jnp.float32)
    target1 = jax.random.randint(k2, (N1,), 0, C1, dtype=jnp.int32)
    out1 = jax.block_until_ready(label_smoothing_cross_entropy(preds1, target1))
    ref1 = _reference(preds1, target1)
    assert jnp.allclose(out1, ref1, atol=1e-5, rtol=1e-5), (out1, ref1)

    # Case 2: bf16 logits, forced small tile -> multiple grid steps + masked
    # ragged tail (N % tile_n != 0), exercising the tiled/parallel path.
    N2, C2 = 50, 160
    preds2 = jax.random.normal(k3, (N2, C2), dtype=jnp.bfloat16)
    target2 = jax.random.randint(k4, (N2,), 0, C2, dtype=jnp.int32)
    out2 = jax.block_until_ready(
        label_smoothing_cross_entropy(preds2, target2, tile_n=16))
    ref2 = _reference(preds2, target2)
    assert jnp.allclose(out2, ref2, atol=1e-3, rtol=1e-3), (out2, ref2)

    # Case 3: default tile policy (>=2 tiles enforced), ragged tail, sum
    # reduction; also checks the per-generation budget path end-to-end.
    N3, C3 = 40, 256
    preds3 = jax.random.normal(k5, (N3, C3), dtype=jnp.float32)
    target3 = jax.random.randint(k6, (N3,), 0, C3, dtype=jnp.int32)
    out3 = jax.block_until_ready(
        label_smoothing_cross_entropy(preds3, target3, reduction="sum"))
    ref3 = _reference(preds3, target3, reduction="sum")
    assert jnp.allclose(out3, ref3, atol=1e-3, rtol=1e-5), (out3, ref3)

    print("KERNEL_OK")
</pallas_src>

<mosaic_0001>
module attributes {stable_mosaic.version = 11 : i64} {
  func.func @_lsce_tile_kernel(%arg0: i32, %arg1: memref<8x32xf32, #tpu.memory_space<vmem>>, %arg2: memref<8x1xi32, #tpu.memory_space<vmem>>, %arg3: memref<8x128xf32, #tpu.memory_space<vmem>>) attributes {dimension_semantics = [#tpu.dimension_semantics<parallel>], iteration_bounds = array<i64: 1>, scalar_prefetch = 0 : i64, scratch_operands = 0 : i64, tpu.core_type = #tpu.core_type<tc>, window_params = [{transform_indices = @transform_0, window_bounds = array<i64: 8, 32>}, {transform_indices = @transform_1, window_bounds = array<i64: 8, 1>}, {transform_indices = @transform_2, window_bounds = array<i64: 8, 128>}]} {
    %c0 = arith.constant 0 : index
    %c0_0 = arith.constant 0 : index
    %0 = vector.load %arg1[%c0, %c0_0] : memref<8x32xf32, #tpu.memory_space<vmem>>, vector<8x32xf32>
    %cst = arith.constant dense<0xFF800000> : vector<8xf32>
    %1 = vector.multi_reduction <maximumf>, %0, %cst [1] : vector<8x32xf32> to vector<8xf32>
    %2 = vector.shape_cast %1 : vector<8xf32> to vector<8x1xf32>
    %3 = vector.broadcast %2 : vector<8x1xf32> to vector<8x32xf32>
    %4 = arith.subf %0, %3 : vector<8x32xf32>
    %5 = math.exp %4 : vector<8x32xf32>
    %cst_1 = arith.constant dense<0.000000e+00> : vector<8xf32>
    %6 = vector.multi_reduction <add>, %5, %cst_1 [1] : vector<8x32xf32> to vector<8xf32>
    %7 = vector.shape_cast %6 : vector<8xf32> to vector<8x1xf32>
    %8 = math.log %7 : vector<8x1xf32>
    %cst_2 = arith.constant dense<0.000000e+00> : vector<8xf32>
    %9 = vector.multi_reduction <add>, %4, %cst_2 [1] : vector<8x32xf32> to vector<8xf32>
    %10 = vector.shape_cast %9 : vector<8xf32> to vector<8x1xf32>
    %11 = tpu.iota {dimensions = array<i32: 1>} : vector<8x32xi32>
    %c0_3 = arith.constant 0 : index
    %c0_4 = arith.constant 0 : index
    %12 = vector.load %arg2[%c0_3, %c0_4] : memref<8x1xi32, #tpu.memory_space<vmem>>, vector<8x1xi32>
    %13 = vector.broadcast %12 : vector<8x1xi32> to vector<8x32xi32>
    %14 = arith.cmpi eq, %11, %13 : vector<8x32xi32>
    %c0_i32 = arith.constant 0 : i32
    %15 = arith.sitofp %c0_i32 : i32 to f32
    %16 = vector.broadcast %15 : f32 to vector<8x32xf32>
    %17 = arith.select %14, %0, %16 : vector<8x32xi1>, vector<8x32xf32>
    %cst_5 = arith.constant dense<0.000000e+00> : vector<8xf32>
    %18 = vector.multi_reduction <add>, %17, %cst_5 [1] : vector<8x32xf32> to vector<8xf32>
    %19 = vector.shape_cast %18 : vector<8xf32> to vector<8x1xf32>
    %cst_6 = arith.constant 3.200000e+01 : f32
    %20 = vector.broadcast %cst_6 : f32 to vector<8x1xf32>
    %21 = arith.mulf %20, %8 : vector<8x1xf32>
    %22 = arith.subf %10, %21 : vector<8x1xf32>
    %cst_7 = arith.constant 0.000000e+00 : f32
    %23 = vector.broadcast %cst_7 : f32 to vector<8x1xf32>
    %24 = arith.subf %23, %22 : vector<8x1xf32>
    %25 = arith.subf %19, %2 : vector<8x1xf32>
    %26 = arith.subf %25, %8 : vector<8x1xf32>
    %cst_8 = arith.constant 0.000000e+00 : f32
    %27 = vector.broadcast %cst_8 : f32 to vector<8x1xf32>
    %28 = arith.subf %27, %26 : vector<8x1xf32>
    %c8_i32 = arith.constant 8 : i32
    %29 = arith.muli %arg0, %c8_i32 : i32
    %30 = tpu.iota {dimensions = array<i32: 0>} : vector<8x1xi32>
    %31 = vector.broadcast %29 : i32 to vector<8x1xi32>
    %32 = arith.addi %31, %30 : vector<8x1xi32>
    %c8_i32_9 = arith.constant 8 : i32
    %33 = vector.broadcast %c8_i32_9 : i32 to vector<8x1xi32>
    %34 = arith.cmpi slt, %32, %33 : vector<8x1xi32>
    %cst_10 = arith.constant 0.000000e+00 : f32
    %35 = vector.broadcast %cst_10 : f32 to vector<8x1xf32>
    %36 = arith.select %34, %24, %35 : vector<8x1xi1>, vector<8x1xf32>
    %37 = vector.shape_cast %36 : vector<8x1xf32> to vector<1x8x1xf32>
    %cst_11 = arith.constant dense<0.000000e+00> : vector<1xf32>
    %38 = vector.multi_reduction <add>, %37, %cst_11 [1, 2] : vector<1x8x1xf32> to vector<1xf32>
    %39 = vector.shape_cast %38 : vector<1xf32> to vector<1x1x1xf32>
    %40 = vector.extract %39[0, 0, 0] : f32 from vector<1x1x1xf32>
    %cst_12 = arith.constant 0.000000e+00 : f32
    %41 = vector.broadcast %cst_12 : f32 to vector<8x1xf32>
    %42 = arith.select %34, %28, %41 : vector<8x1xi1>, vector<8x1xf32>
    %43 = vector.shape_cast %42 : vector<8x1xf32> to vector<1x8x1xf32>
    %cst_13 = arith.constant dense<0.000000e+00> : vector<1xf32>
    %44 = vector.multi_reduction <add>, %43, %cst_13 [1, 2] : vector<1x8x1xf32> to vector<1xf32>
    %45 = vector.shape_cast %44 : vector<1xf32> to vector<1x1x1xf32>
    %46 = vector.extract %45[0, 0, 0] : f32 from vector<1x1x1xf32>
    %47 = tpu.iota {dimensions = array<i32: 0>} : vector<8x128xi32>
    %48 = tpu.iota {dimensions = array<i32: 1>} : vector<8x128xi32>
    %c0_i32_14 = arith.constant 0 : i32
    %49 = vector.broadcast %c0_i32_14 : i32 to vector<8x128xi32>
    %50 = arith.cmpi eq, %47, %49 : vector<8x128xi32>
    %c0_i32_15 = arith.constant 0 : i32
    %51 = vector.broadcast %c0_i32_15 : i32 to vector<8x128xi32>
    %52 = arith.cmpi eq, %48, %51 : vector<8x128xi32>
    %53 = arith.andi %50, %52 : vector<8x128xi1>
    %c0_i32_16 = arith.constant 0 : i32
    %54 = vector.broadcast %c0_i32_16 : i32 to vector<8x128xi32>
    %55 = arith.cmpi eq, %47, %54 : vector<8x128xi32>
    %c1_i32 = arith.constant 1 : i32
    %56 = vector.broadcast %c1_i32 : i32 to vector<8x128xi32>
    %57 = arith.cmpi eq, %48, %56 : vector<8x128xi32>
    %58 = arith.andi %55, %57 : vector<8x128xi1>
    %cst_17 = arith.constant 0.000000e+00 : f32
    %59 = vector.broadcast %46 : f32 to vector<8x128xf32>
    %60 = vector.broadcast %cst_17 : f32 to vector<8x128xf32>
    %61 = arith.select %58, %59, %60 : vector<8x128xi1>, vector<8x128xf32>
    %62 = vector.broadcast %40 : f32 to vector<8x128xf32>
    %63 = arith.select %53, %62, %61 : vector<8x128xi1>, vector<8x128xf32>
    %c0_18 = arith.constant 0 : index
    %c0_19 = arith.constant 0 : index
    %64 = vector.load %arg3[%c0_18, %c0_19] : memref<8x128xf32, #tpu.memory_space<vmem>>, vector<8x128xf32>
    tpu.vector_store %arg3[%c0_18, %c0_19], %63 {strides = array<i32>} : memref<8x128xf32, #tpu.memory_space<vmem>>, vector<8x128xf32>,
    return
  }
  func.func @transform_0(%arg0: i32) -> (i32, i32) {
    %c0_i32 = arith.constant 0 : i32
    %c0_i32_0 = arith.constant 0 : i32
    return %arg0, %c0_i32 : i32, i32
  }
  func.func @transform_1(%arg0: i32) -> (i32, i32) {
    %c0_i32 = arith.constant 0 : i32
    %c0_i32_0 = arith.constant 0 : i32
    return %arg0, %c0_i32 : i32, i32
  }
  func.func @transform_2(%arg0: i32) -> (i32, i32) {
    %c0_i32 = arith.constant 0 : i32
    %c0_i32_0 = arith.constant 0 : i32
    return %arg0, %c0_i32 : i32, i32
  }
}

</mosaic_0001>

<llo_original>
// kernel: tpu_custom_call.1
$region0: #{tpu_custom_call.1}
  #allocation0 [shape = 'u32[]', space=smem, size = 0x4, offset = 0x4, fixed_abs, tag = 'smem constant byte address 0x4 - core index']
  #allocation1 [shape = 'u32[72,128]{1,0:T(1,128)}', space=vmem, size = 0x9000, scoped, tag = 'internal scratch']
  %s0 = inlined_call_operand.vmem [shape: f32[8,32], index: 0, kind: input, shape index: {}]
  %s1 = inlined_call_operand.vmem [shape: s32[8,1], index: 1, kind: input, shape index: {}]
  %s2 = inlined_call_operand.hbm [shape: f32[8,128], index: 2, kind: output, shape index: {}]
  %s3 = sld [smem:[#allocation0]]
  $region18: #{tpu_custom_call.1} parent=0
    _
  %s5 = ssub.s32 1, %s3
  %s6 = scalar_select 0, %s5, %s3
  $region1: #{tpu_custom_call.1} parent=0
    #allocation2 [shape = 'u8[4096]{0}', space=vmem, size = 0x1000, scoped, tag = 'output window, operand 0, single buffered']
    #allocation3 [shape = 's32[1]{0}', space=sflag, size = 0x4, scoped, tag = 'scoped memory for tpu_custom_call.1']
    %7 = vsyncpa [#allocation3], 0
    // Predicated region
    $region2: #{tpu_custom_call.1} parent=1 // pred_check
      _
    $region3: #{tpu_custom_call.1} parent=1 // pred_check_branch
      %9 = sbr.rel (0) target = $region5
    $region4: #{tpu_custom_call.1} parent=1 // pred_region
      _
    $region5: #{tpu_custom_call.1} parent=1 // pred_fallthru
      _
    // Predicated region
    $region6: #{tpu_custom_call.1} parent=1 // pred_check
      _
    $region7: #{tpu_custom_call.1} parent=1 // pred_check_branch
      %11 = sbr.rel (0) target = $region9
    $region8: #{tpu_custom_call.1} parent=1 // pred_region
      _
    $region9: #{tpu_custom_call.1} parent=1 // pred_fallthru
      _
    %v12 = vld [vmem:[%s0] sm:$0xff]
    %vm13 = vcmask 261120
    %v14 = vsel %vm13, %v12, -inf
    %15 = vmax.xlane.f32.xlu0 %v14
    %v16 = vpop.xlane.xlu0 %15
    %v17 = vsub.f32 %v12, %v16
    %v18 = vmul.f32 %v17, 1.442695
    %v19 = vpow.pop %v18
    %v20 = vsel %vm13, %v19, 0.0
    %21 = vadd.xlane.f32.xlu0 %v20
    %v22 = vpop.xlane.xlu0 %21
    %v23 = vlog2.pop %v22
    %v24 = vmul.f32 %v23, 0.6931472
    %v25 = vsel %vm13, %v17, 0.0
    %26 = vadd.xlane.f32.xlu0 %v25
    %v27 = vpop.xlane.xlu0 %26
    %v28 = vlaneseq
    %v29 = vand.u32 %v28, 127
    %v30 = vld [vmem:[%s1] sm:$0xff]
    %31 = vset.pattern.permute.xlu0 0
    %32 = vperm.xlu0 %31, %v30
    %v33 = vpop.permute.xlu0 %32
    %vm34 = vcmp.eq.s32.totalorder %v29, %v33
    %v35 = vsel %vm34, %v12, 0.0
    %v36 = vsel %vm13, %v35, 0.0
    %37 = vadd.xlane.f32.xlu0 %v36
    %v38 = vpop.xlane.xlu0 %37
    %v39 = vmul.f32 %v24, 32.0
    %v40 = vsub.f32 %v27, %v39
    %v41 = vsub.f32 0.0, %v40
    %v42 = vsub.f32 %v38, %v16
    %v43 = vsub.f32 %v42, %v24
    %v44 = vsub.f32 0.0, %v43
    %s45 = smul.u32 0, 8
    %v46 = vlaneseq
    %v47 = vshrl.u32 %v46, 7
    %v48 = vstv %s45
    %v49 = vadd.s32 %v48, %v47
    %vm50 = vcmp.lt.s32.totalorder %v49, 8
    %v51 = vsel %vm50, %v41, 0.0
    %vm52 = vcmask 7168
    %v53 = vsel %vm52, %v51, 0.0
    %54 = vadd.xlane.f32.xlu0 %v53
    %v55 = vpop.xlane.xlu0 %54
    %v56 = vrot.slane %v55, 4
    %v57 = vadd.f32 %v55, %v56
    %v58 = vrot.slane %v57, 2
    %v59 = vadd.f32 %v57, %v58
    %v60 = vrot.slane %v59, 1
    %v61 = vadd.f32 %v59, %v60
    %s62 = vtos %v61
    %v63 = vsel %vm50, %v44, 0.0
    %v64 = vsel %vm52, %v63, 0.0
    %65 = vadd.xlane.f32.xlu0 %v64
    %v66 = vpop.xlane.xlu0 %65
    %v67 = vrot.slane %v66, 4
    %v68 = vadd.f32 %v66, %v67
    %v69 = vrot.slane %v68, 2
    %v70 = vadd.f32 %v68, %v69
    %v71 = vrot.slane %v70, 1
    %v72 = vadd.f32 %v70, %v71
    %s73 = vtos %v72
    %vm74 = vcmp.eq.s32.totalorder %v47, 0
    %vm75 = vcmp.eq.s32.totalorder %v29, 0
    %vm76 = vmand %vm74, %vm75
    %vm77 = vcmp.eq.s32.totalorder %v29, 1
    %vm78 = vmand %vm74, %vm77
    %v79 = vstv %s73
    %v80 = vsel %vm78, %v79, 0.0
    %v81 = vstv %s62
    %v82 = vsel %vm76, %v81, %v80
    %83 = vst [vmem:[#allocation2] sm:$0xff] %v82
    // Predicated region
    $region10: #{tpu_custom_call.1} parent=1 // pred_check
      _
    $region11: #{tpu_custom_call.1} parent=1 // pred_check_branch
      %85 = sbr.rel (0) target = $region13
    $region12: #{tpu_custom_call.1} parent=1 // pred_region
      %87 = vsyncadd [#allocation3], 0
      %s89 = sshll.u32 [#allocation2], 4
      %s90 = int_to_ptr.vmem [resolvable:$true] %s89
      %s91 = sshll.u32 %s2, 4
      %s92 = int_to_ptr.hbm [resolvable:$true] %s91
      %94 = dma.vmem_to_hbm [thread:$0]  %s90, 128, %s92, [#allocation3]
    $region13: #{tpu_custom_call.1} parent=1 // pred_fallthru
      _
    // Predicated region
    $region14: #{tpu_custom_call.1} parent=1 // pred_check
      _
    $region15: #{tpu_custom_call.1} parent=1 // pred_check_branch
      %96 = sbr.rel (0) target = $region17
    $region16: #{tpu_custom_call.1} parent=1 // pred_region
      %98 = dma.done [#allocation3], 128
    $region17: #{tpu_custom_call.1} parent=1 // pred_fallthru
      _
    %99 = vsyncpa [#allocation3], 1

</llo_original>
